<compile_context>
chip_gen: v5e
topology: v5e:2x2
jax: 0.10.0
libtpu: 0.0.40
codegen_flags: <defaults>
</compile_context>

<pallas_src>
import jax
import jax.numpy as jnp
from jax.experimental import pallas as pl
from jax.experimental.pallas import tpu as pltpu


def _masked_linear_kernel_f32out(x_ref, w_ref, b_ref, o_ref):
    """f32 output: accumulate directly into the resident output block."""
    k = pl.program_id(2)

    @pl.when(k == 0)
    def _():
        o_ref[...] = jnp.zeros_like(o_ref)

    o_ref[...] += jnp.dot(x_ref[...], w_ref[...],
                          preferred_element_type=jnp.float32)

    # Bias is added exactly once, at the K-finalize step.
    @pl.when(k == pl.num_programs(2) - 1)
    def _():
        o_ref[...] += b_ref[...]


def _masked_linear_kernel_acc(x_ref, w_ref, b_ref, o_ref, acc_ref):
    """Generic output dtype: f32 accumulator scratch, cast at finalize."""
    k = pl.program_id(2)

    @pl.when(k == 0)
    def _():
        acc_ref[...] = jnp.zeros_like(acc_ref)

    acc_ref[...] += jnp.dot(x_ref[...], w_ref[...],
                            preferred_element_type=jnp.float32)

    @pl.when(k == pl.num_programs(2) - 1)
    def _():
        o_ref[...] = (acc_ref[...] + b_ref[...]).astype(o_ref.dtype)


def _rup(v, m):
    return -(-v // m) * m


def _default_tn():
    # v5e's MXU is 4x128x128 -> tn=128 fills it; v6e/v7x are 256-wide.
    try:
        kind = jax.devices()[0].device_kind.lower()
    except Exception:
        return 256
    if "v5 lite" in kind or "v5e" in kind:
        return 128
    return 256


def masked_linear(x, weight, mask, bias, *, compute_dtype=None,
                  tm=None, tn=None, tk=None):
    """y = x @ (weight * mask).T + bias  (MaskedLinear.forward).

    x: (B, in_d), weight/mask: (out_d, in_d), bias: (out_d,) -> (B, out_d).
    compute_dtype: MXU operand dtype (e.g. jnp.bfloat16); accumulation is
    always f32.  Defaults to x.dtype (exact match with the PyTorch module).
    """
    B, in_d = x.shape
    out_d = weight.shape[0]
    out_dtype = x.dtype
    if compute_dtype is None:
        compute_dtype = x.dtype
    comp_bytes = jnp.dtype(compute_dtype).itemsize

    # --- one-shot weight prep (single fused pass over W): mask * W, transpose
    # to K-major (in_d, out_d), cast to the MXU dtype.  If weights/mask are
    # static (inference), hoist this out of the per-call path.
    wm = (weight * mask).T.astype(compute_dtype)          # (in_d, out_d)
    xc = x.astype(compute_dtype)                          # (B, in_d)
    bf = bias.astype(jnp.float32).reshape(1, out_d)       # (1, out_d) f32

    # --- tile selection (lane-aligned, clamped so tiny problems stay 1 tile)
    if tm is None:
        tm = 256
    if tn is None:
        tn = _default_tn()
    if tk is None:
        tk = 2048 if comp_bytes <= 2 else 1024
    tm = min(tm, _rup(B, 8))
    tn = min(tn, _rup(out_d, 128))
    tk = min(tk, _rup(in_d, 128))

    # v7x shards the 'parallel' grid axes over 2 TensorCores: make sure the
    # (i, j) grid has >= 2 tiles whenever the problem allows it.
    def _par_tiles(tm_, tn_):
        return (_rup(B, tm_) // tm_) * (_rup(out_d, tn_) // tn_)

    while _par_tiles(tm, tn) < 2 and tn > 128:
        tn //= 2
    while _par_tiles(tm, tn) < 2 and tm > 8:
        tm = _rup(max(8, tm // 2), 8)

    Mp, Np, Kp = _rup(B, tm), _rup(out_d, tn), _rup(in_d, tk)

    # Zero-pad only when shapes are not tile multiples; padded K columns
    # contribute 0, padded M rows / N columns are sliced off below.
    if (Mp, Kp) != (B, in_d):
        xc = jnp.pad(xc, ((0, Mp - B), (0, Kp - in_d)))
    if (Kp, Np) != (in_d, out_d):
        wm = jnp.pad(wm, ((0, Kp - in_d), (0, Np - out_d)))
    if Np != out_d:
        bf = jnp.pad(bf, ((0, 0), (0, Np - out_d)))

    grid = (Mp // tm, Np // tn, Kp // tk)

    in_specs = [
        pl.BlockSpec((tm, tk), lambda i, j, k: (i, k)),   # x (compute_dtype)
        pl.BlockSpec((tk, tn), lambda i, j, k: (k, j)),   # pre-masked W^T
        pl.BlockSpec((1, tn), lambda i, j, k: (0, j)),    # bias (f32)
    ]
    out_spec = pl.BlockSpec((tm, tn), lambda i, j, k: (i, j))

    if jnp.dtype(out_dtype) == jnp.dtype(jnp.float32):
        kernel = _masked_linear_kernel_f32out
        scratch_shapes = []
    else:
        kernel = _masked_linear_kernel_acc
        scratch_shapes = [pltpu.VMEM((tm, tn), jnp.float32)]

    out = pl.pallas_call(
        kernel,
        out_shape=jax.ShapeDtypeStruct((Mp, Np), out_dtype),
        grid_spec=pltpu.PrefetchScalarGridSpec(
            num_scalar_prefetch=0,
            grid=grid,
            in_specs=in_specs,
            out_specs=out_spec,
            scratch_shapes=scratch_shapes,
        ),
        compiler_params=pltpu.CompilerParams(
            dimension_semantics=("parallel", "parallel", "arbitrary"),
            vmem_limit_bytes=32 << 20,   # safe on v7x (64 MiB physical VMEM)
        ),
    )(xc, wm, bf)

    if (Mp, Np) != (B, out_d):
        out = out[:B, :out_d]
    return out


if __name__ == "__main__":
    key = jax.random.PRNGKey(0)
    kx, kw, km = jax.random.split(key, 3)

    B, in_d, out_d = 8, 256, 256

    # Deterministic xavier_normal_ init: std = sqrt(2 / (fan_in + fan_out)).
    std = (2.0 / (in_d + out_d)) ** 0.5
    weight = std * jax.random.normal(kw, (out_d, in_d), dtype=jnp.float32)
    bias = jnp.zeros((out_d,), dtype=jnp.float32)
    # The module's registered buffer is all-ones; use a random binary mask to
    # exercise the pruning path deterministically.
    mask = (jax.random.uniform(km, (out_d, in_d)) > 0.3).astype(jnp.float32)
    x = jax.random.normal(kx, (B, in_d), dtype=jnp.float32)

    # Plain-JAX reference (same math as F.linear(x, W*mask, bias)).
    y_ref = x @ (weight * mask).T + bias

    # 1) Exact-semantics f32 path (default tiles -> direct output accumulation).
    y = masked_linear(x, weight, mask, bias)
    jax.block_until_ready(y)
    assert y.shape == (B, out_d)
    assert jnp.allclose(y, y_ref, atol=1e-4, rtol=1e-5)

    # 2) Multi-K-step f32 path (exercises k==0 init / k==last bias add).
    y_tiled = masked_linear(x, weight, mask, bias, tm=8, tn=128, tk=128)
    jax.block_until_ready(y_tiled)
    assert jnp.allclose(y_tiled, y_ref, atol=1e-4, rtol=1e-5)

    # 3) bf16-MXU operands, f32 accumulation + f32 output (looser tolerance).
    y_bf16 = masked_linear(x, weight, mask, bias, compute_dtype=jnp.bfloat16)
    jax.block_until_ready(y_bf16)
    assert jnp.allclose(y_bf16, y_ref, atol=3e-2, rtol=3e-2)

    # 4) bf16 input/output path (exercises the f32-acc-scratch kernel).
    y_bf = masked_linear(x.astype(jnp.bfloat16), weight, mask, bias)
    jax.block_until_ready(y_bf)
    assert y_bf.dtype == jnp.bfloat16
    assert jnp.allclose(y_bf.astype(jnp.float32), y_ref, atol=1e-1, rtol=1e-1)

    print("KERNEL_OK")
</pallas_src>

<mosaic_0001>
module attributes {stable_mosaic.version = 11 : i64} {
  func.func @_masked_linear_kernel_f32out(%arg0: i32, %arg1: i32, %arg2: i32, %arg3: memref<8x256xf32, #tpu.memory_space<vmem>>, %arg4: memref<256x128xf32, #tpu.memory_space<vmem>>, %arg5: memref<1x128xf32, #tpu.memory_space<vmem>>, %arg6: memref<8x128xf32, #tpu.memory_space<vmem>>) attributes {dimension_semantics = [#tpu.dimension_semantics<parallel>, #tpu.dimension_semantics<parallel>, #tpu.dimension_semantics<arbitrary>], iteration_bounds = array<i64: 1, 2, 1>, scalar_prefetch = 0 : i64, scratch_operands = 0 : i64, tpu.core_type = #tpu.core_type<tc>, window_params = [{transform_indices = @transform_0, window_bounds = array<i64: 8, 256>}, {transform_indices = @transform_1, window_bounds = array<i64: 256, 128>}, {transform_indices = @transform_2, window_bounds = array<i64: 1, 128>}, {transform_indices = @transform_3, window_bounds = array<i64: 8, 128>}]} {
    %c0_i32 = arith.constant 0 : i32
    %0 = arith.cmpi eq, %arg2, %c0_i32 : i32
    %1 = arith.extui %0 : i1 to i32
    %c0_i32_0 = arith.constant 0 : i32
    %2 = arith.cmpi ne, %1, %c0_i32_0 : i32
    scf.if %2 {
      %cst_10 = arith.constant 0.000000e+00 : f32
      %12 = vector.broadcast %cst_10 : f32 to vector<8x128xf32>
      %c0_11 = arith.constant 0 : index
      %c0_12 = arith.constant 0 : index
      %13 = vector.load %arg6[%c0_11, %c0_12] : memref<8x128xf32, #tpu.memory_space<vmem>>, vector<8x128xf32>
      tpu.vector_store %arg6[%c0_11, %c0_12], %12 {strides = array<i32>} : memref<8x128xf32, #tpu.memory_space<vmem>>, vector<8x128xf32>,
    } else {
    }
    %c0 = arith.constant 0 : index
    %c0_1 = arith.constant 0 : index
    %3 = vector.load %arg6[%c0, %c0_1] : memref<8x128xf32, #tpu.memory_space<vmem>>, vector<8x128xf32>
    %c0_2 = arith.constant 0 : index
    %c0_3 = arith.constant 0 : index
    %4 = vector.load %arg3[%c0_2, %c0_3] : memref<8x256xf32, #tpu.memory_space<vmem>>, vector<8x256xf32>
    %c0_4 = arith.constant 0 : index
    %c0_5 = arith.constant 0 : index
    %5 = vector.load %arg4[%c0_4, %c0_5] : memref<256x128xf32, #tpu.memory_space<vmem>>, vector<256x128xf32>
    %cst = arith.constant dense<0.000000e+00> : vector<8x128xf32>
    %6 = tpu.matmul %4, %5, %cst {dimension_numbers = #tpu.dot_dimension_numbers<[1], [0], [0], [1], [0, 0, 1, 1], [], []>} : vector<8x256xf32>, vector<256x128xf32>, vector<8x128xf32> -> vector<8x128xf32>
    %7 = arith.addf %3, %6 : vector<8x128xf32>
    %c0_6 = arith.constant 0 : index
    %c0_7 = arith.constant 0 : index
    %8 = vector.load %arg6[%c0_6, %c0_7] : memref<8x128xf32, #tpu.memory_space<vmem>>, vector<8x128xf32>
    tpu.vector_store %arg6[%c0_6, %c0_7], %7 {strides = array<i32>} : memref<8x128xf32, #tpu.memory_space<vmem>>, vector<8x128xf32>,
    %c0_i32_8 = arith.constant 0 : i32
    %9 = arith.cmpi eq, %arg2, %c0_i32_8 : i32
    %10 = arith.extui %9 : i1 to i32
    %c0_i32_9 = arith.constant 0 : i32
    %11 = arith.cmpi ne, %10, %c0_i32_9 : i32
    scf.if %11 {
      %c0_10 = arith.constant 0 : index
      %c0_11 = arith.constant 0 : index
      %12 = vector.load %arg6[%c0_10, %c0_11] : memref<8x128xf32, #tpu.memory_space<vmem>>, vector<8x128xf32>
      %c0_12 = arith.constant 0 : index
      %c0_13 = arith.constant 0 : index
      %13 = vector.load %arg5[%c0_12, %c0_13] : memref<1x128xf32, #tpu.memory_space<vmem>>, vector<1x128xf32>
      %14 = vector.broadcast %13 : vector<1x128xf32> to vector<8x128xf32>
      %15 = arith.addf %12, %14 : vector<8x128xf32>
      %c0_14 = arith.constant 0 : index
      %c0_15 = arith.constant 0 : index
      %16 = vector.load %arg6[%c0_14, %c0_15] : memref<8x128xf32, #tpu.memory_space<vmem>>, vector<8x128xf32>
      tpu.vector_store %arg6[%c0_14, %c0_15], %15 {strides = array<i32>} : memref<8x128xf32, #tpu.memory_space<vmem>>, vector<8x128xf32>,
    } else {
    }
    return
  }
  func.func @transform_0(%arg0: i32, %arg1: i32, %arg2: i32) -> (i32, i32) {
    %c0_i32 = arith.constant 0 : i32
    return %arg0, %arg2 : i32, i32
  }
  func.func @transform_1(%arg0: i32, %arg1: i32, %arg2: i32) -> (i32, i32) {
    %c0_i32 = arith.constant 0 : i32
    return %arg2, %arg1 : i32, i32
  }
  func.func @transform_2(%arg0: i32, %arg1: i32, %arg2: i32) -> (i32, i32) {
    %c0_i32 = arith.constant 0 : i32
    %c0_i32_0 = arith.constant 0 : i32
    return %c0_i32, %arg1 : i32, i32
  }
  func.func @transform_3(%arg0: i32, %arg1: i32, %arg2: i32) -> (i32, i32) {
    %c0_i32 = arith.constant 0 : i32
    return %arg0, %arg1 : i32, i32
  }
}

</mosaic_0001>

<llo_original>
// kernel: tpu_custom_call.1
$region0: #{tpu_custom_call.1}
  #allocation0 [shape = 'u32[]', space=smem, size = 0x4, offset = 0x4, fixed_abs, tag = 'smem constant byte address 0x4 - core index']
  #allocation1 [shape = 'u32[72,128]{1,0:T(1,128)}', space=vmem, size = 0x9000, scoped, tag = 'internal scratch']
  %s0 = inlined_call_operand.hbm [shape: f32[8,256], index: 0, kind: input, shape index: {}]
  %s1 = inlined_call_operand.hbm [shape: f32[256,256], index: 1, kind: input, shape index: {}]
  %s2 = inlined_call_operand.hbm [shape: f32[1,256], index: 2, kind: input, shape index: {}]
  %s3 = inlined_call_operand.hbm [shape: f32[8,256], index: 3, kind: output, shape index: {}]
  %s4 = sld [smem:[#allocation0]]
  $region65: #{tpu_custom_call.1} parent=0
    _
  %s6 = ssub.s32 1, %s4
  %s7 = scalar_select 0, %s6, %s4
  $region1: #{tpu_custom_call.1} parent=0
    #allocation2 [shape = 'u8[8192]{0}', space=vmem, size = 0x2000, scoped, tag = 'input window, operand 0, single buffered']
    #allocation3 [shape = 's32[2]{0}', space=sflag, size = 0x8, scoped, tag = 'scoped memory for tpu_custom_call.1']
    #allocation4 [shape = 's32[2]{0}', space=sflag, size = 0x8, scoped, tag = 'scoped memory for tpu_custom_call.1']
    #allocation5 [shape = 'u8[262144]{0}', space=vmem, size = 0x40000, scoped, tag = 'input window, operand 1']
    #allocation6 [shape = 's32[2]{0}', space=sflag, size = 0x8, scoped, tag = 'scoped memory for tpu_custom_call.1']
    #allocation7 [shape = 'u8[1024]{0}', space=vmem, size = 0x400, scoped, tag = 'input window, operand 2']
    #allocation8 [shape = 'u8[8192]{0}', space=vmem, size = 0x2000, scoped, tag = 'output window, operand 0']
    %8 = vsyncpa [#allocation3], 0
    %9 = vsyncpa [#allocation6], 0
    %s10 = scalar_lea.sflag [#allocation6], 1
    %11 = vsyncpa %s10, 0
    %12 = vsyncpa [#allocation4], 0
    %s13 = scalar_lea.sflag [#allocation4], 1
    %14 = vsyncpa %s13, 0
    loop: start=0, step=1, limit=4
    $region2: #{tpu_custom_call.1} parent=1 // loop_pre_header
      _
    $region3: #{tpu_custom_call.1} parent=1 // loop_header
      %s16 = sphi 0, %s20
      %p17 = scmp.ge.s32.totalorder %s16, 4
      %s23 = sphi 0, %s42
      %s24 = sphi 0, %s38
      %s25 = sphi 0, %s34
      %s26 = sphi 0, %s23
      %s27 = sphi 0, %s24
      %s28 = sphi 0, %s25
      %s29 = sphi 0, %s26
      %s30 = sphi 0, %s27
      %s31 = sphi 0, %s28
      %s47 = sphi 0, %s49
      %s50 = sphi 0, %s47
      %s51 = sphi 0, %s50
      %s67 = sphi 0, %s51
      %s75 = sphi 0, %s77
      %s78 = sphi 0, %s75
      %s79 = sphi 0, %s78
      %s95 = sphi 0, %s79
      %s101 = sphi 0, %s103
      %s104 = sphi 0, %s101
      %s105 = sphi 0, %s104
      %s121 = sphi 0, %s105
      %s129 = sphi 0, %s131
      %s132 = sphi 0, %s129
      %s133 = sphi 0, %s132
      %s149 = sphi 0, %s133
    $region4: #{tpu_custom_call.1} parent=1 // loop_header_branch
      %19 = sbr.rel (%p17) target = $region8
    $region5: #{tpu_custom_call.1} parent=1 // loop_body
      %s21 = ssub.s32 %s16, 1
      %s22 = ssub.s32 %s16, 2
      %s32 = sadd.s32 1, %s25
      %p33 = scmp.ge.s32.totalorder %s32, 1
      %s34 = scalar_select %p33, 0, %s32
      %s35 = sadd.s32 1, %s24
      %s36 = scalar_select %p33, %s35, %s24
      %p37 = scmp.ge.s32.totalorder %s36, 2
      %s38 = scalar_select %p37, 0, %s36
      %s39 = sadd.s32 1, %s23
      %s40 = scalar_select %p37, %s39, %s23
      %p41 = scmp.ge.s32.totalorder %s40, 1
      %s42 = scalar_select %p41, 0, %s40
      %s43 = ssub.s32 %s23, %s42
      %s44 = ssub.s32 %s25, %s34
      %s45 = sor.u32 %s43, %s44
      %p46 = scmp.eq.s32.totalorder %s45, 0
      %s48 = sadd.s32 %s47, 1
      %s49 = scalar_select %p46, %s47, %s48
      %p52 = pneg %p46
      %p53 = scmp.eq.s32.totalorder %s16, 1
      %p54 = por %p52, %p53
      %p55 = scmp.ne.s32.totalorder %s47, %s50
      %p56 = scmp.eq.s32.totalorder %s16, 0
      %p57 = por %p55, %p56
      %p58 = scmp.ne.s32.totalorder %s47, %s50
      %p59 = scmp.eq.s32.totalorder %s21, 1
      %p60 = por %p58, %p59
      %p61 = scmp.ne.s32.totalorder %s50, %s51
      %p62 = scmp.eq.s32.totalorder %s21, 0
      %p63 = por %p61, %p62
      %p64 = scmp.ne.s32.totalorder %s50, %s51
      %p65 = scmp.eq.s32.totalorder %s22, 1
      %p66 = por %p64, %p65
      %p68 = scmp.ne.s32.totalorder %s51, %s67
      %p69 = scmp.eq.s32.totalorder %s22, 0
      %p70 = por %p68, %p69
      %s71 = ssub.s32 %s25, %s34
      %s72 = ssub.s32 %s24, %s38
      %s73 = sor.u32 %s71, %s72
      %p74 = scmp.eq.s32.totalorder %s73, 0
      %s76 = sadd.s32 %s75, 1
      %s77 = scalar_select %p74, %s75, %s76
      %p80 = pneg %p74
      %p81 = scmp.eq.s32.totalorder %s16, 1
      %p82 = por %p80, %p81
      %p83 = scmp.ne.s32.totalorder %s75, %s78
      %p84 = scmp.eq.s32.totalorder %s16, 0
      %p85 = por %p83, %p84
      %p86 = scmp.ne.s32.totalorder %s75, %s78
      %p87 = scmp.eq.s32.totalorder %s21, 1
      %p88 = por %p86, %p87
      %p89 = scmp.ne.s32.totalorder %s78, %s79
      %p90 = scmp.eq.s32.totalorder %s21, 0
      %p91 = por %p89, %p90
      %p92 = scmp.ne.s32.totalorder %s78, %s79
      %p93 = scmp.eq.s32.totalorder %s22, 1
      %p94 = por %p92, %p93
      %p96 = scmp.ne.s32.totalorder %s79, %s95
      %p97 = scmp.eq.s32.totalorder %s22, 0
      %p98 = por %p96, %p97
      %s99 = ssub.s32 %s24, %s38
      %p100 = scmp.eq.s32.totalorder %s99, 0
      %s102 = sadd.s32 %s101, 1
      %s103 = scalar_select %p100, %s101, %s102
      %p106 = pneg %p100
      %p107 = scmp.eq.s32.totalorder %s16, 1
      %p108 = por %p106, %p107
      %p109 = scmp.ne.s32.totalorder %s101, %s104
      %p110 = scmp.eq.s32.totalorder %s16, 0
      %p111 = por %p109, %p110
      %p112 = scmp.ne.s32.totalorder %s101, %s104
      %p113 = scmp.eq.s32.totalorder %s21, 1
      %p114 = por %p112, %p113
      %p115 = scmp.ne.s32.totalorder %s104, %s105
      %p116 = scmp.eq.s32.totalorder %s21, 0
      %p117 = por %p115, %p116
      %p118 = scmp.ne.s32.totalorder %s104, %s105
      %p119 = scmp.eq.s32.totalorder %s22, 1
      %p120 = por %p118, %p119
      %p122 = scmp.ne.s32.totalorder %s105, %s121
      %p123 = scmp.eq.s32.totalorder %s22, 0
      %p124 = por %p122, %p123
      %s125 = ssub.s32 %s23, %s42
      %s126 = ssub.s32 %s24, %s38
      %s127 = sor.u32 %s125, %s126
      %p128 = scmp.eq.s32.totalorder %s127, 0
      %s130 = sadd.s32 %s129, 1
      %s131 = scalar_select %p128, %s129, %s130
      %p134 = pneg %p128
      %p135 = scmp.eq.s32.totalorder %s16, 1
      %p136 = por %p134, %p135
      %p137 = scmp.ne.s32.totalorder %s129, %s132
      %p138 = scmp.eq.s32.totalorder %s16, 0
      %p139 = por %p137, %p138
      %p140 = scmp.ne.s32.totalorder %s129, %s132
      %p141 = scmp.eq.s32.totalorder %s21, 1
      %p142 = por %p140, %p141
      %p143 = scmp.ne.s32.totalorder %s132, %s133
      %p144 = scmp.eq.s32.totalorder %s21, 0
      %p145 = por %p143, %p144
      %p146 = scmp.ne.s32.totalorder %s132, %s133
      %p147 = scmp.eq.s32.totalorder %s22, 1
      %p148 = por %p146, %p147
      %p150 = scmp.ne.s32.totalorder %s133, %s149
      %p151 = scmp.eq.s32.totalorder %s22, 0
      %p152 = por %p150, %p151
      %p153 = scmp.le.s32.totalorder 1, %s16
      %p154 = scmp.lt.s32.totalorder %s16, 3
      %p155 = pnand %p153, %p154
      %p156 = pneg %p155
      // Predicated region
      $region9: #{tpu_custom_call.1} parent=5 // pred_check
        _
      $region10: #{tpu_custom_call.1} parent=5 // pred_check_branch
        %158 = sbr.rel (%p155) target = $region12
      $region11: #{tpu_custom_call.1} parent=5 // pred_region
        %s159 = ssub.s32 %s16, 1
        // Predicated region
        $region13: #{tpu_custom_call.1} parent=11 // pred_check
          %p160 = pneg %p63
        $region14: #{tpu_custom_call.1} parent=11 // pred_check_branch
          %162 = sbr.rel (%p160) target = $region16
        $region15: #{tpu_custom_call.1} parent=11 // pred_region
          %s163 = smul.u32 2, %s28
          %165 = vsyncadd [#allocation3], 0
          %s166 = smul.addr %s26, 2
          %s167 = sadd.s32 %s163, %s166
          %s168 = smul.addr %s167, 8
          %s169 = scalar_lea.hbm %s0, %s168
          %s171 = sshll.u32 %s169, 4
          %s172 = int_to_ptr.hbm [resolvable:$true] %s171
          %s173 = sshll.u32 [#allocation2], 4
          %s174 = int_to_ptr.vmem [resolvable:$true] %s173
          %176 = dma.hbm_to_vmem [thread:$0]  %s172, 256, %s174, [#allocation3]
        $region16: #{tpu_custom_call.1} parent=11 // pred_fallthru
          _
      $region12: #{tpu_custom_call.1} parent=5 // pred_fallthru
        _
      %p177 = scmp.lt.s32.totalorder %s16, 2
      // Predicated region
      $region17: #{tpu_custom_call.1} parent=5 // pred_check
        %p178 = pneg %p177
      $region18: #{tpu_custom_call.1} parent=5 // pred_check_branch
        %180 = sbr.rel (%p178) target = $region20
      $region19: #{tpu_custom_call.1} parent=5 // pred_region
        // Predicated region
        $region21: #{tpu_custom_call.1} parent=19 // pred_check
          %p181 = pneg %p85
        $region22: #{tpu_custom_call.1} parent=19 // pred_check_branch
          %183 = sbr.rel (%p181) target = $region24
        $region23: #{tpu_custom_call.1} parent=19 // pred_region
          %s184 = sand.u32 %s16, 1
          %s185 = scalar_lea.sflag [#allocation6], %s184
          %s186 = sand.u32 %s75, 1
          %s187 = smul.addr %s186, 256
          %s188 = scalar_lea.vmem [#allocation5], %s187
          %s189 = smul.u32 32, %s25
          %191 = vsyncadd %s185, 0
          %s192 = smul.addr %s189, 2
          %s193 = sadd.s32 %s24, %s192
          %s194 = smul.addr %s193, 8
          %s195 = scalar_lea.hbm %s1, %s194
          %s196 = sshll.u32 %s195, 4
          %s197 = int_to_ptr.hbm [resolvable:$true] %s196
          %s198 = sshll.u32 %s188, 4
          %s199 = int_to_ptr.vmem [resolvable:$true] %s198
          %204 = dma.hbm_to_vmem [thread:$0]  %s197, 4096, %s199, %s185, 256, 128, 8
        $region24: #{tpu_custom_call.1} parent=19 // pred_fallthru
          _
        // Predicated region
        $region25: #{tpu_custom_call.1} parent=19 // pred_check
          %p205 = pneg %p111
        $region26: #{tpu_custom_call.1} parent=19 // pred_check_branch
          %207 = sbr.rel (%p205) target = $region28
        $region27: #{tpu_custom_call.1} parent=19 // pred_region
          %s208 = sand.u32 %s16, 1
          %s209 = scalar_lea.sflag [#allocation6], %s208
          %s210 = sand.u32 %s101, 1
          %s211 = scalar_lea.vmem [#allocation7], %s210
          %213 = vsyncadd %s209, 0
          %s214 = scalar_lea.hbm %s2, %s24
          %s216 = sshll.u32 %s214, 4
          %s217 = int_to_ptr.hbm [resolvable:$true] %s216
          %s218 = sshll.u32 %s211, 4
          %s219 = int_to_ptr.vmem [resolvable:$true] %s218
          %221 = dma.hbm_to_vmem [thread:$0]  %s217, 16, %s219, %s209
        $region28: #{tpu_custom_call.1} parent=19 // pred_fallthru
          _
      $region20: #{tpu_custom_call.1} parent=5 // pred_fallthru
        _
      %p222 = scmp.le.s32.totalorder 1, %s16
      %p223 = scmp.lt.s32.totalorder %s16, 3
      %p224 = pnand %p222, %p223
      %p225 = pneg %p224
      // Predicated region
      $region29: #{tpu_custom_call.1} parent=5 // pred_check
        _
      $region30: #{tpu_custom_call.1} parent=5 // pred_check_branch
        %227 = sbr.rel (%p224) target = $region32
      $region31: #{tpu_custom_call.1} parent=5 // pred_region
        %s228 = ssub.s32 %s16, 1
        // Predicated region
        $region33: #{tpu_custom_call.1} parent=31 // pred_check
          %p229 = pneg %p63
        $region34: #{tpu_custom_call.1} parent=31 // pred_check_branch
          %231 = sbr.rel (%p229) target = $region36
        $region35: #{tpu_custom_call.1} parent=31 // pred_region
          %233 = dma.done [#allocation3], 256
        $region36: #{tpu_custom_call.1} parent=31 // pred_fallthru
          _
        %s234 = sand.u32 %s21, 1
        %s235 = scalar_lea.sflag [#allocation6], %s234
        %s236 = sand.u32 %s78, 1
        %s237 = smul.addr %s236, 256
        %s238 = scalar_lea.vmem [#allocation5], %s237
        // Predicated region
        $region37: #{tpu_custom_call.1} parent=31 // pred_check
          %p239 = pneg %p91
        $region38: #{tpu_custom_call.1} parent=31 // pred_check_branch
          %241 = sbr.rel (%p239) target = $region40
        $region39: #{tpu_custom_call.1} parent=31 // pred_region
          %243 = dma.done %s235, 4096
        $region40: #{tpu_custom_call.1} parent=31 // pred_fallthru
          _
        %s244 = sand.u32 %s21, 1
        %s245 = scalar_lea.sflag [#allocation6], %s244
        %s246 = sand.u32 %s104, 1
        %s247 = scalar_lea.vmem [#allocation7], %s246
        // Predicated region
        $region41: #{tpu_custom_call.1} parent=31 // pred_check
          %p248 = pneg %p117
        $region42: #{tpu_custom_call.1} parent=31 // pred_check_branch
          %250 = sbr.rel (%p248) target = $region44
        $region43: #{tpu_custom_call.1} parent=31 // pred_region
          %252 = dma.done %s245, 16
        $region44: #{tpu_custom_call.1} parent=31 // pred_fallthru
          _
        %p253 = pneg %p63
        %p254 = pneg %p60
        %s255 = sand.u32 %s21, 1
        %s256 = scalar_lea.sflag [#allocation6], %s255
        %s257 = sand.u32 %s78, 1
        %s258 = smul.addr %s257, 256
        %s259 = scalar_lea.vmem [#allocation5], %s258
        %p260 = pneg %p91
        %p261 = pneg %p88
        %s262 = sand.u32 %s21, 1
        %s263 = scalar_lea.sflag [#allocation6], %s262
        %s264 = sand.u32 %s104, 1
        %s265 = scalar_lea.vmem [#allocation7], %s264
        %p266 = pneg %p117
        %p267 = pneg %p114
        %p268 = pneg %p145
        %p269 = pneg %p142
        %s270 = sand.u32 %s132, 1
        %s271 = scalar_lea.sflag [#allocation4], %s270
        %s272 = sand.u32 %s132, 1
        %s273 = smul.addr %s272, 8
        %s274 = scalar_lea.vmem [#allocation8], %s273
        %s275 = smul.u32 2, %s28
        %s276 = smul.u32 32, %s28
        %p277 = scmp.eq.s32.totalorder %s28, 0
        // Predicated region
        $region45: #{tpu_custom_call.1} parent=31 // pred_check
          %p278 = pneg %p277
        $region46: #{tpu_custom_call.1} parent=31 // pred_check_branch
          %280 = sbr.rel (%p278) target = $region48
        $region47: #{tpu_custom_call.1} parent=31 // pred_region
          %281 = vst [vmem:[%s274] sm:$0xff] 0.0
        $region48: #{tpu_custom_call.1} parent=31 // pred_fallthru
          _
        %v282 = vld [vmem:[%s274] sm:$0xff]
        %v283 = vld [vmem:[#allocation2] sm:$0xff]
        %v284 = vld [vmem:[#allocation2 + $0x8] sm:$0xff]
        %v285 = vld [vmem:[%s238] sm:$0xff]
        %v286 = vld [vmem:[%s238 + $0x8] sm:$0xff]
        %v287 = vld [vmem:[%s238 + $0x10] sm:$0xff]
        %v288 = vld [vmem:[%s238 + $0x18] sm:$0xff]
        %v289 = vld [vmem:[%s238 + $0x20] sm:$0xff]
        %v290 = vld [vmem:[%s238 + $0x28] sm:$0xff]
        %v291 = vld [vmem:[%s238 + $0x30] sm:$0xff]
        %v292 = vld [vmem:[%s238 + $0x38] sm:$0xff]
        %v293 = vld [vmem:[%s238 + $0x40] sm:$0xff]
        %v294 = vld [vmem:[%s238 + $0x48] sm:$0xff]
        %v295 = vld [vmem:[%s238 + $0x50] sm:$0xff]
        %v296 = vld [vmem:[%s238 + $0x58] sm:$0xff]
        %v297 = vld [vmem:[%s238 + $0x60] sm:$0xff]
        %v298 = vld [vmem:[%s238 + $0x68] sm:$0xff]
        %v299 = vld [vmem:[%s238 + $0x70] sm:$0xff]
        %v300 = vld [vmem:[%s238 + $0x78] sm:$0xff]
        %v301 = vld [vmem:[%s238 + $0x80] sm:$0xff]
        %v302 = vld [vmem:[%s238 + $0x88] sm:$0xff]
        %v303 = vld [vmem:[%s238 + $0x90] sm:$0xff]
        %v304 = vld [vmem:[%s238 + $0x98] sm:$0xff]
        %v305 = vld [vmem:[%s238 + $0xa0] sm:$0xff]
        %v306 = vld [vmem:[%s238 + $0xa8] sm:$0xff]
        %v307 = vld [vmem:[%s238 + $0xb0] sm:$0xff]
        %v308 = vld [vmem:[%s238 + $0xb8] sm:$0xff]
        %v309 = vld [vmem:[%s238 + $0xc0] sm:$0xff]
        %v310 = vld [vmem:[%s238 + $0xc8] sm:$0xff]
        %v311 = vld [vmem:[%s238 + $0xd0] sm:$0xff]
        %v312 = vld [vmem:[%s238 + $0xd8] sm:$0xff]
        %v313 = vld [vmem:[%s238 + $0xe0] sm:$0xff]
        %v314 = vld [vmem:[%s238 + $0xe8] sm:$0xff]
        %v315 = vld [vmem:[%s238 + $0xf0] sm:$0xff]
        %v316 = vld [vmem:[%s238 + $0xf8] sm:$0xff]
        %317 = vmatpush.msra.mxu0 %v300
        %318 = vmatpush.msra.mxu0 %v299
        %319 = vmatpush.msra.mxu0 %v298
        %320 = vmatpush.msra.mxu0 %v297
        %321 = vmatpush.msra.mxu0 %v296
        %322 = vmatpush.msra.mxu0 %v295
        %323 = vmatpush.msra.mxu0 %v294
        %324 = vmatpush.msra.mxu0 %v293
        %325 = vmatpush.msra.mxu0 %v292
        %326 = vmatpush.msra.mxu0 %v291
        %327 = vmatpush.msra.mxu0 %v290
        %328 = vmatpush.msra.mxu0 %v289
        %329 = vmatpush.msra.mxu0 %v288
        %330 = vmatpush.msra.mxu0 %v287
        %331 = vmatpush.msra.mxu0 %v286
        %332 = vmatpush.msra.mxu0 %v285
        %333 = vmatmul.f32.gmra.mxu0 %v283
        %v334 = vpop.f32.mrf.mxu0
        %v335 = vadd.f32 0.0, %v334
        %336 = vdwg.mxu0
        %337 = vmatpush.msra.mxu0 %v316
        %338 = vmatpush.msra.mxu0 %v315
        %339 = vmatpush.msra.mxu0 %v314
        %340 = vmatpush.msra.mxu0 %v313
        %341 = vmatpush.msra.mxu0 %v312
        %342 = vmatpush.msra.mxu0 %v311
        %343 = vmatpush.msra.mxu0 %v310
        %344 = vmatpush.msra.mxu0 %v309
        %345 = vmatpush.msra.mxu0 %v308
        %346 = vmatpush.msra.mxu0 %v307
        %347 = vmatpush.msra.mxu0 %v306
        %348 = vmatpush.msra.mxu0 %v305
        %349 = vmatpush.msra.mxu0 %v304
        %350 = vmatpush.msra.mxu0 %v303
        %351 = vmatpush.msra.mxu0 %v302
        %352 = vmatpush.msra.mxu0 %v301
        %353 = vmatmul.f32.gmra.mxu0 %v284
        %v354 = vpop.f32.mrf.mxu0
        %v355 = vadd.f32 %v335, %v354
        %356 = vdwg.mxu0
        %v357 = vadd.f32 %v282, %v355
        %358 = vst [vmem:[%s274] sm:$0xff] %v357
        // Predicated region
        $region49: #{tpu_custom_call.1} parent=31 // pred_check
          %p359 = pneg %p277
        $region50: #{tpu_custom_call.1} parent=31 // pred_check_branch
          %361 = sbr.rel (%p359) target = $region52
        $region51: #{tpu_custom_call.1} parent=31 // pred_region
          %v362 = vld [vmem:[%s274] sm:$0xff]
          %v363 = vld [vmem:[%s247] sm:$0x1]
          %v365 = vperm.slane %v363, 0
          %v367 = vadd.f32 %v362, %v365
          %368 = vst [vmem:[%s274] sm:$0xff] %v367
        $region52: #{tpu_custom_call.1} parent=31 // pred_fallthru
          _
        %s369 = sand.u32 %s132, 1
        %s370 = scalar_lea.sflag [#allocation4], %s369
        %s371 = sand.u32 %s132, 1
        %s372 = smul.addr %s371, 8
        %s373 = scalar_lea.vmem [#allocation8], %s372
        // Predicated region
        $region53: #{tpu_custom_call.1} parent=31 // pred_check
          %p374 = pneg %p142
        $region54: #{tpu_custom_call.1} parent=31 // pred_check_branch
          %376 = sbr.rel (%p374) target = $region56
        $region55: #{tpu_custom_call.1} parent=31 // pred_region
          %378 = vsyncadd %s370, 0
          %s379 = smul.addr %s26, 2
          %s380 = sadd.s32 %s27, %s379
          %s381 = smul.addr %s380, 8
          %s382 = scalar_lea.hbm %s3, %s381
          %s384 = sshll.u32 %s373, 4
          %s385 = int_to_ptr.vmem [resolvable:$true] %s384
          %s386 = sshll.u32 %s382, 4
          %s387 = int_to_ptr.hbm [resolvable:$true] %s386
          %389 = dma.vmem_to_hbm [thread:$0]  %s385, 128, %s387, %s370
        $region56: #{tpu_custom_call.1} parent=31 // pred_fallthru
          _
      $region32: #{tpu_custom_call.1} parent=5 // pred_fallthru
        _
      %p390 = scmp.le.s32.totalorder 2, %s16
      // Predicated region
      $region57: #{tpu_custom_call.1} parent=5 // pred_check
        %p391 = pneg %p390
      $region58: #{tpu_custom_call.1} parent=5 // pred_check_branch
        %393 = sbr.rel (%p391) target = $region60
      $region59: #{tpu_custom_call.1} parent=5 // pred_region
        %s394 = ssub.s32 %s16, 2
        // Predicated region
        $region61: #{tpu_custom_call.1} parent=59 // pred_check
          %p395 = pneg %p148
        $region62: #{tpu_custom_call.1} parent=59 // pred_check_branch
          %397 = sbr.rel (%p395) target = $region64
        $region63: #{tpu_custom_call.1} parent=59 // pred_region
          %s398 = sand.u32 %s133, 1
          %s399 = scalar_lea.sflag [#allocation4], %s398
          %s400 = sand.u32 %s133, 1
          %s401 = smul.addr %s400, 8
          %s402 = scalar_lea.vmem [#allocation8], %s401
          %404 = dma.done %s399, 128
        $region64: #{tpu_custom_call.1} parent=59 // pred_fallthru
          _
      $region60: #{tpu_custom_call.1} parent=5 // pred_fallthru
        _
    $region6: #{tpu_custom_call.1} parent=1 // loop_footer
      %s20 = sadd.s32 1, %s16
    $region7: #{tpu_custom_call.1} parent=1 // loop_footer_branch
      %15 = sbr.rel target = $region3
    $region8: #{tpu_custom_call.1} parent=1 // loop_exit
      _
    %405 = vsyncpa [#allocation3], 1
    %s406 = scalar_lea.sflag [#allocation3], 1
    %407 = vsyncpa %s406, 1
    %408 = vsyncpa [#allocation6], 1
    %s409 = scalar_lea.sflag [#allocation6], 1
    %410 = vsyncpa %s409, 1
    %411 = vsyncpa [#allocation4], 1
    %s412 = scalar_lea.sflag [#allocation4], 1
    %413 = vsyncpa %s412, 1

</llo_original>
